<compile_context>
chip_gen: v7x
topology: tpu7x:2x2x1
jax: 0.10.0
libtpu: 0.0.40
codegen_flags: <defaults>
</compile_context>

<pallas_src>
import functools

import jax
import jax.numpy as jnp
from jax.experimental import pallas as pl
from jax.experimental.pallas import tpu as pltpu


def adapter_kernel(x_ref, w1_ref, b1_ref, w2_ref, b2_ref, out_ref, *,
                   num_times, thresh, tau, ratio):
    B = x_ref.shape[0]
    C, H = w1_ref.shape
    T = num_times

    # Load once; cast native dtype -> f32 inside VMEM (no-op if already f32).
    x = x_ref[...].astype(jnp.float32)                         # (B, T*C)

    # Stack time slices t-major along sublanes -> (T*B, C).  Each slice
    # x[:, t*C:(t+1)*C] is lane-aligned (C is a multiple of 128), so this is
    # vreg placement, not a retiling copy.
    x_stack = jnp.concatenate([x[:, t * C:(t + 1) * C] for t in range(T)],
                              axis=0)                          # (T*B, C)

    # global_f Linear with BN1 / BN2 / b1 pre-folded into (w1_ref, b1_ref):
    # one MXU matmul covers every time step.  Kept in f32 on purpose — the LIF
    # hard threshold can flip 0/1 spikes under bf16-operand rounding.
    # Dropout: inference-mode identity.
    # TODO(synk): training-mode Dropout (random mask) not implemented.
    h = jnp.dot(x_stack, w1_ref[...],
                preferred_element_type=jnp.float32) + b1_ref[...]   # (T*B, H)

    # LIFSpike: the only truly sequential part; short unrolled VPU recurrence.
    # Element-wise work stays in f32 (v5e has no bf16 VPU/EUP).
    mem = jnp.zeros((B, H), jnp.float32)
    spikes = []
    for t in range(T):
        mem = mem * tau + h[t * B:(t + 1) * B, :]
        fired = mem >= thresh                       # fire_function forward
        spikes.append(fired.astype(jnp.bfloat16))   # exact 0/1 -> lossless bf16
        mem = jnp.where(fired, 0.0, mem)            # leaner reset (one select)
    s_stack = jnp.concatenate(spikes, axis=0)                  # (T*B, H) bf16

    # view_f: Linear(H -> C) + ReLU.  bf16 x bf16 MXU operands, f32 accumulate.
    v = jnp.dot(s_stack, w2_ref[...],
                preferred_element_type=jnp.float32) + b2_ref[...]   # (T*B, C)
    v = jnp.maximum(v, 0.0)

    # Residual fusion written per time slice (lane-dense, C = 128 wide) back
    # into the (B, T*C) output block; cast to the native output dtype.
    for t in range(T):
        blended = (v[t * B:(t + 1) * B, :] * ratio
                   + x[:, t * C:(t + 1) * C] * (1.0 - ratio))
        out_ref[:, t * C:(t + 1) * C] = blended.astype(out_ref.dtype)


def fold_adapter_params(params, *, eps=1e-5):
    """Fold inference-mode BN1, BN2 and the Linear-1 bias into one (W1, bias)
    pair.  Pure parameter preprocessing — call ONCE per parameter set, outside
    the per-step hot path.

        hb = ((x*s1 + sh1) @ W1^T + b1) * s2 + sh2
           = x @ (s1[:,None] * W1^T * s2[None,:]) + ((sh1 @ W1^T) + b1)*s2 + sh2
    """
    bn1s = params["bn1_gamma"] / jnp.sqrt(params["bn1_var"] + eps)
    bn1b = params["bn1_beta"] - params["bn1_mean"] * bn1s
    bn2s = params["bn2_gamma"] / jnp.sqrt(params["bn2_var"] + eps)
    bn2b = params["bn2_beta"] - params["bn2_mean"] * bn2s

    w1t = params["w1"].T                                       # (C, H)
    C, H = w1t.shape
    w1f = (bn1s[:, None] * w1t) * bn2s[None, :]                # (C, H) folded
    b1f = ((bn1b @ w1t) + params["b1"]) * bn2s + bn2b          # (H,)  folded
    return {
        "w1f": w1f.astype(jnp.float32),                        # f32: LIF threshold fidelity
        "b1f": b1f.reshape(1, H).astype(jnp.float32),
        "w2t": params["w2"].T.astype(jnp.bfloat16),            # (H, C) bf16 MXU operand
        "b2": params["b2"].reshape(1, C).astype(jnp.float32),
    }


@functools.partial(jax.jit, static_argnames=("num_times", "in_features",
                                             "adapter_ratio", "thresh", "tau"))
def adapter_forward(feat, folded, *, num_times, in_features,
                    adapter_ratio=0.5, thresh=0.5, tau=0.25):
    B = feat.shape[0]
    T, C = num_times, in_features
    H = C // 8
    assert feat.shape == (B, T * C)

    kernel = functools.partial(adapter_kernel, num_times=T, thresh=thresh,
                               tau=tau, ratio=adapter_ratio)

    # Single-block launch: whole working set (~50 KB) is VMEM-resident.
    # Scale-up note: for large B, tile along B with a "parallel" grid axis
    # (engages both v7x TensorCores + pipelined DMA); at B=8 that only adds
    # per-step overhead.
    return pl.pallas_call(
        kernel,
        out_shape=jax.ShapeDtypeStruct((B, T * C), feat.dtype),   # native dtype
        grid=(1,),
        in_specs=[
            pl.BlockSpec((B, T * C), lambda i: (0, 0)),   # feat (native dtype)
            pl.BlockSpec((C, H), lambda i: (0, 0)),       # folded W1^T (f32)
            pl.BlockSpec((1, H), lambda i: (0, 0)),       # folded bias1 (f32)
            pl.BlockSpec((H, C), lambda i: (0, 0)),       # W2^T (bf16)
            pl.BlockSpec((1, C), lambda i: (0, 0)),       # b2 (f32)
        ],
        out_specs=pl.BlockSpec((B, T * C), lambda i: (0, 0)),
        input_output_aliases={0: 0},   # feat and out share shape/dtype -> reuse buffer
        compiler_params=pltpu.CompilerParams(
            dimension_semantics=("arbitrary",)),
    )(feat, folded["w1f"], folded["b1f"], folded["w2t"], folded["b2"])


def adapter_reference(feat, params, *, num_times, in_features,
                      adapter_ratio=0.5, thresh=0.5, tau=0.25, eps=1e-5,
                      w2_bf16=False):
    """Plain-JAX replica of the PyTorch forward (eval mode).

    w2_bf16=True mirrors the kernel's bf16 MXU operand for the second Linear
    (matched-precision check); w2_bf16=False is the pure f32 spec reference.
    """
    B = feat.shape[0]
    T, C = num_times, in_features
    H = C // 8
    w2 = params["w2"]
    if w2_bf16:
        w2 = w2.astype(jnp.bfloat16).astype(jnp.float32)
    x = feat.astype(jnp.float32).reshape(B, T, C).transpose(1, 0, 2)
    mem = jnp.zeros((B, H), jnp.float32)
    outs = []
    for t in range(T):
        xt = x[t]
        xb = (xt - params["bn1_mean"]) / jnp.sqrt(params["bn1_var"] + eps) \
             * params["bn1_gamma"] + params["bn1_beta"]
        h = xb @ params["w1"].T + params["b1"]
        hb = (h - params["bn2_mean"]) / jnp.sqrt(params["bn2_var"] + eps) \
             * params["bn2_gamma"] + params["bn2_beta"]
        mem = mem * tau + hb
        spike = (mem - thresh >= 0.0).astype(jnp.float32)
        mem = (1.0 - spike) * mem
        v = jnp.maximum(spike @ w2.T + params["b2"], 0.0)
        outs.append(v)
    out = jnp.stack(outs).transpose(1, 0, 2).reshape(B, T * C)
    return out * adapter_ratio + feat.astype(jnp.float32) * (1.0 - adapter_ratio)


def init_params(key, in_features):
    C = in_features
    H = C // 8
    k1, k2, k3, k4 = jax.random.split(key, 4)
    bound1 = 1.0 / jnp.sqrt(C)
    bound2 = 1.0 / jnp.sqrt(H)
    return {
        # BatchNorm1d(C): affine weights + running stats (eval mode).
        "bn1_gamma": jnp.ones((C,), jnp.float32),
        "bn1_beta": jnp.zeros((C,), jnp.float32),
        "bn1_mean": jnp.zeros((C,), jnp.float32),
        "bn1_var": jnp.ones((C,), jnp.float32),
        # Linear(C, H)
        "w1": jax.random.uniform(k1, (H, C), jnp.float32, -bound1, bound1),
        "b1": jax.random.uniform(k2, (H,), jnp.float32, -bound1, bound1),
        # BatchNorm1d(H)
        "bn2_gamma": jnp.ones((H,), jnp.float32),
        "bn2_beta": jnp.zeros((H,), jnp.float32),
        "bn2_mean": jnp.zeros((H,), jnp.float32),
        "bn2_var": jnp.ones((H,), jnp.float32),
        # Linear(H, C)
        "w2": jax.random.uniform(k3, (C, H), jnp.float32, -bound2, bound2),
        "b2": jax.random.uniform(k4, (C,), jnp.float32, -bound2, bound2),
    }


if __name__ == "__main__":
    # Shapes consistent with the module:
    #   cfg.MODEL.PROJECT.NUM_TIMES = 4, cfg.MODEL.BACKBONE.CHANNEL = 128,
    #   cfg.MODEL.ADAPTER.RATIO = 0.5, batch of 8 views.
    B, T, C = 8, 4, 128
    ratio = 0.5

    key = jax.random.PRNGKey(0)
    kfeat, kparam = jax.random.split(key)
    feat = jax.random.normal(kfeat, (B, T * C), jnp.float32)
    params = init_params(kparam, C)

    # Fold BN + bias ONCE (inference constants), outside the per-call path.
    folded = fold_adapter_params(params)

    out = adapter_forward(feat, folded, num_times=T, in_features=C,
                          adapter_ratio=ratio)
    out = jax.block_until_ready(out)
    assert out.shape == (B, T * C)
    assert out.dtype == feat.dtype          # native-dtype output
    out32 = out.astype(jnp.float32)

    # 1) Matched-precision check (mirrors the kernel's bf16 w2 operand): tight.
    ref_matched = adapter_reference(feat, params, num_times=T, in_features=C,
                                    adapter_ratio=ratio, w2_bf16=True)
    assert jnp.allclose(out32, ref_matched, atol=1e-4, rtol=1e-4), \
        "mismatch vs matched-precision reference"

    # 2) Spec-fidelity check vs the pure-f32 PyTorch-equivalent reference:
    #    tolerance covers only the bf16 rounding of w2 (<= ~4e-3 on the output).
    ref_spec = adapter_reference(feat, params, num_times=T, in_features=C,
                                 adapter_ratio=ratio, w2_bf16=False)
    assert jnp.allclose(out32, ref_spec, atol=1e-2, rtol=1e-2), \
        "mismatch vs f32 spec reference"

    print("KERNEL_OK")
</pallas_src>

<mosaic_0001>
module attributes {stable_mosaic.version = 11 : i64} {
  func.func @adapter_kernel(%arg0: i32, %arg1: memref<8x512xf32, #tpu.memory_space<vmem>>, %arg2: memref<128x16xf32, #tpu.memory_space<vmem>>, %arg3: memref<1x16xf32, #tpu.memory_space<vmem>>, %arg4: memref<16x128xbf16, #tpu.memory_space<vmem>>, %arg5: memref<1x128xf32, #tpu.memory_space<vmem>>, %arg6: memref<8x512xf32, #tpu.memory_space<vmem>>) attributes {dimension_semantics = [#tpu.dimension_semantics<arbitrary>], iteration_bounds = array<i64: 1>, scalar_prefetch = 0 : i64, scratch_operands = 0 : i64, tpu.core_type = #tpu.core_type<tc>, window_params = [{pipeline_mode = #tpu.pipeline_mode<synchronous>, transform_indices = @transform_0, window_bounds = array<i64: 8, 512>}, {pipeline_mode = #tpu.pipeline_mode<synchronous>, transform_indices = @transform_1, window_bounds = array<i64: 128, 16>}, {pipeline_mode = #tpu.pipeline_mode<synchronous>, transform_indices = @transform_2, window_bounds = array<i64: 1, 16>}, {pipeline_mode = #tpu.pipeline_mode<synchronous>, transform_indices = @transform_3, window_bounds = array<i64: 16, 128>}, {pipeline_mode = #tpu.pipeline_mode<synchronous>, transform_indices = @transform_4, window_bounds = array<i64: 1, 128>}, {pipeline_mode = #tpu.pipeline_mode<synchronous>, transform_indices = @transform_5, window_bounds = array<i64: 8, 512>}]} {
    %c0 = arith.constant 0 : index
    %c0_0 = arith.constant 0 : index
    %0 = vector.load %arg1[%c0, %c0_0] : memref<8x512xf32, #tpu.memory_space<vmem>>, vector<8x512xf32>
    %1 = vector.extract_strided_slice %0 {offsets = [0, 0], sizes = [8, 128], strides = [1, 1]} : vector<8x512xf32> to vector<8x128xf32>
    %2 = vector.extract_strided_slice %0 {offsets = [0, 128], sizes = [8, 128], strides = [1, 1]} : vector<8x512xf32> to vector<8x128xf32>
    %3 = vector.extract_strided_slice %0 {offsets = [0, 256], sizes = [8, 128], strides = [1, 1]} : vector<8x512xf32> to vector<8x128xf32>
    %4 = vector.extract_strided_slice %0 {offsets = [0, 384], sizes = [8, 128], strides = [1, 1]} : vector<8x512xf32> to vector<8x128xf32>
    %5 = tpu.concatenate %1, %2, %3, %4 in 0 : vector<8x128xf32>, vector<8x128xf32>, vector<8x128xf32>, vector<8x128xf32> -> vector<32x128xf32>
    %c0_1 = arith.constant 0 : index
    %c0_2 = arith.constant 0 : index
    %6 = vector.load %arg2[%c0_1, %c0_2] : memref<128x16xf32, #tpu.memory_space<vmem>>, vector<128x16xf32>
    %cst = arith.constant dense<0.000000e+00> : vector<32x16xf32>
    %7 = tpu.matmul %5, %6, %cst {dimension_numbers = #tpu.dot_dimension_numbers<[1], [0], [0], [1], [0, 0, 1, 1], [], []>} : vector<32x128xf32>, vector<128x16xf32>, vector<32x16xf32> -> vector<32x16xf32>
    %c0_3 = arith.constant 0 : index
    %c0_4 = arith.constant 0 : index
    %8 = vector.load %arg3[%c0_3, %c0_4] : memref<1x16xf32, #tpu.memory_space<vmem>>, vector<1x16xf32>
    %9 = vector.broadcast %8 : vector<1x16xf32> to vector<32x16xf32>
    %10 = arith.addf %7, %9 : vector<32x16xf32>
    %cst_5 = arith.constant 0.000000e+00 : f32
    %11 = vector.broadcast %cst_5 : f32 to vector<8x16xf32>
    %cst_6 = arith.constant 2.500000e-01 : f32
    %12 = vector.broadcast %cst_6 : f32 to vector<8x16xf32>
    %13 = arith.mulf %11, %12 : vector<8x16xf32>
    %14 = vector.extract_strided_slice %10 {offsets = [0, 0], sizes = [8, 16], strides = [1, 1]} : vector<32x16xf32> to vector<8x16xf32>
    %15 = arith.addf %13, %14 : vector<8x16xf32>
    %cst_7 = arith.constant 5.000000e-01 : f32
    %16 = vector.broadcast %cst_7 : f32 to vector<8x16xf32>
    %17 = arith.cmpf oge, %15, %16 : vector<8x16xf32>
    %18 = arith.extui %17 : vector<8x16xi1> to vector<8x16xi32>
    %19 = arith.sitofp %18 : vector<8x16xi32> to vector<8x16xf32>
    %20 = arith.truncf %19 : vector<8x16xf32> to vector<8x16xbf16>
    %cst_8 = arith.constant 0.000000e+00 : f32
    %21 = vector.broadcast %cst_8 : f32 to vector<8x16xf32>
    %22 = arith.select %17, %21, %15 : vector<8x16xi1>, vector<8x16xf32>
    %cst_9 = arith.constant 2.500000e-01 : f32
    %23 = vector.broadcast %cst_9 : f32 to vector<8x16xf32>
    %24 = arith.mulf %22, %23 : vector<8x16xf32>
    %25 = vector.extract_strided_slice %10 {offsets = [8, 0], sizes = [8, 16], strides = [1, 1]} : vector<32x16xf32> to vector<8x16xf32>
    %26 = arith.addf %24, %25 : vector<8x16xf32>
    %cst_10 = arith.constant 5.000000e-01 : f32
    %27 = vector.broadcast %cst_10 : f32 to vector<8x16xf32>
    %28 = arith.cmpf oge, %26, %27 : vector<8x16xf32>
    %29 = arith.extui %28 : vector<8x16xi1> to vector<8x16xi32>
    %30 = arith.sitofp %29 : vector<8x16xi32> to vector<8x16xf32>
    %31 = arith.truncf %30 : vector<8x16xf32> to vector<8x16xbf16>
    %cst_11 = arith.constant 0.000000e+00 : f32
    %32 = vector.broadcast %cst_11 : f32 to vector<8x16xf32>
    %33 = arith.select %28, %32, %26 : vector<8x16xi1>, vector<8x16xf32>
    %cst_12 = arith.constant 2.500000e-01 : f32
    %34 = vector.broadcast %cst_12 : f32 to vector<8x16xf32>
    %35 = arith.mulf %33, %34 : vector<8x16xf32>
    %36 = vector.extract_strided_slice %10 {offsets = [16, 0], sizes = [8, 16], strides = [1, 1]} : vector<32x16xf32> to vector<8x16xf32>
    %37 = arith.addf %35, %36 : vector<8x16xf32>
    %cst_13 = arith.constant 5.000000e-01 : f32
    %38 = vector.broadcast %cst_13 : f32 to vector<8x16xf32>
    %39 = arith.cmpf oge, %37, %38 : vector<8x16xf32>
    %40 = arith.extui %39 : vector<8x16xi1> to vector<8x16xi32>
    %41 = arith.sitofp %40 : vector<8x16xi32> to vector<8x16xf32>
    %42 = arith.truncf %41 : vector<8x16xf32> to vector<8x16xbf16>
    %cst_14 = arith.constant 0.000000e+00 : f32
    %43 = vector.broadcast %cst_14 : f32 to vector<8x16xf32>
    %44 = arith.select %39, %43, %37 : vector<8x16xi1>, vector<8x16xf32>
    %cst_15 = arith.constant 2.500000e-01 : f32
    %45 = vector.broadcast %cst_15 : f32 to vector<8x16xf32>
    %46 = arith.mulf %44, %45 : vector<8x16xf32>
    %47 = vector.extract_strided_slice %10 {offsets = [24, 0], sizes = [8, 16], strides = [1, 1]} : vector<32x16xf32> to vector<8x16xf32>
    %48 = arith.addf %46, %47 : vector<8x16xf32>
    %cst_16 = arith.constant 5.000000e-01 : f32
    %49 = vector.broadcast %cst_16 : f32 to vector<8x16xf32>
    %50 = arith.cmpf oge, %48, %49 : vector<8x16xf32>
    %51 = arith.extui %50 : vector<8x16xi1> to vector<8x16xi32>
    %52 = arith.sitofp %51 : vector<8x16xi32> to vector<8x16xf32>
    %53 = arith.truncf %52 : vector<8x16xf32> to vector<8x16xbf16>
    %54 = tpu.concatenate %20, %31, %42, %53 in 0 : vector<8x16xbf16>, vector<8x16xbf16>, vector<8x16xbf16>, vector<8x16xbf16> -> vector<32x16xbf16>
    %c0_17 = arith.constant 0 : index
    %c0_18 = arith.constant 0 : index
    %55 = vector.load %arg4[%c0_17, %c0_18] : memref<16x128xbf16, #tpu.memory_space<vmem>>, vector<16x128xbf16>
    %cst_19 = arith.constant dense<0.000000e+00> : vector<32x128xf32>
    %56 = tpu.matmul %54, %55, %cst_19 {dimension_numbers = #tpu.dot_dimension_numbers<[1], [0], [0], [1], [0, 0, 1, 1], [], []>} : vector<32x16xbf16>, vector<16x128xbf16>, vector<32x128xf32> -> vector<32x128xf32>
    %c0_20 = arith.constant 0 : index
    %c0_21 = arith.constant 0 : index
    %57 = vector.load %arg5[%c0_20, %c0_21] : memref<1x128xf32, #tpu.memory_space<vmem>>, vector<1x128xf32>
    %58 = vector.broadcast %57 : vector<1x128xf32> to vector<32x128xf32>
    %59 = arith.addf %56, %58 : vector<32x128xf32>
    %cst_22 = arith.constant 0.000000e+00 : f32
    %60 = vector.broadcast %cst_22 : f32 to vector<32x128xf32>
    %61 = arith.maximumf %59, %60 : vector<32x128xf32>
    %62 = vector.extract_strided_slice %61 {offsets = [0, 0], sizes = [8, 128], strides = [1, 1]} : vector<32x128xf32> to vector<8x128xf32>
    %cst_23 = arith.constant 5.000000e-01 : f32
    %63 = vector.broadcast %cst_23 : f32 to vector<8x128xf32>
    %64 = arith.mulf %62, %63 : vector<8x128xf32>
    %65 = vector.extract_strided_slice %0 {offsets = [0, 0], sizes = [8, 128], strides = [1, 1]} : vector<8x512xf32> to vector<8x128xf32>
    %cst_24 = arith.constant 5.000000e-01 : f32
    %66 = vector.broadcast %cst_24 : f32 to vector<8x128xf32>
    %67 = arith.mulf %65, %66 : vector<8x128xf32>
    %68 = arith.addf %64, %67 : vector<8x128xf32>
    %c0_25 = arith.constant 0 : index
    %c0_26 = arith.constant 0 : index
    %69 = vector.load %arg6[%c0_25, %c0_26] : memref<8x512xf32, #tpu.memory_space<vmem>>, vector<8x128xf32>
    tpu.vector_store %arg6[%c0_25, %c0_26], %68 {strides = array<i32>} : memref<8x512xf32, #tpu.memory_space<vmem>>, vector<8x128xf32>,
    %70 = vector.extract_strided_slice %61 {offsets = [8, 0], sizes = [8, 128], strides = [1, 1]} : vector<32x128xf32> to vector<8x128xf32>
    %cst_27 = arith.constant 5.000000e-01 : f32
    %71 = vector.broadcast %cst_27 : f32 to vector<8x128xf32>
    %72 = arith.mulf %70, %71 : vector<8x128xf32>
    %73 = vector.extract_strided_slice %0 {offsets = [0, 128], sizes = [8, 128], strides = [1, 1]} : vector<8x512xf32> to vector<8x128xf32>
    %cst_28 = arith.constant 5.000000e-01 : f32
    %74 = vector.broadcast %cst_28 : f32 to vector<8x128xf32>
    %75 = arith.mulf %73, %74 : vector<8x128xf32>
    %76 = arith.addf %72, %75 : vector<8x128xf32>
    %c0_29 = arith.constant 0 : index
    %c128 = arith.constant 128 : index
    %77 = vector.load %arg6[%c0_29, %c128] : memref<8x512xf32, #tpu.memory_space<vmem>>, vector<8x128xf32>
    tpu.vector_store %arg6[%c0_29, %c128], %76 {strides = array<i32>} : memref<8x512xf32, #tpu.memory_space<vmem>>, vector<8x128xf32>,
    %78 = vector.extract_strided_slice %61 {offsets = [16, 0], sizes = [8, 128], strides = [1, 1]} : vector<32x128xf32> to vector<8x128xf32>
    %cst_30 = arith.constant 5.000000e-01 : f32
    %79 = vector.broadcast %cst_30 : f32 to vector<8x128xf32>
    %80 = arith.mulf %78, %79 : vector<8x128xf32>
    %81 = vector.extract_strided_slice %0 {offsets = [0, 256], sizes = [8, 128], strides = [1, 1]} : vector<8x512xf32> to vector<8x128xf32>
    %cst_31 = arith.constant 5.000000e-01 : f32
    %82 = vector.broadcast %cst_31 : f32 to vector<8x128xf32>
    %83 = arith.mulf %81, %82 : vector<8x128xf32>
    %84 = arith.addf %80, %83 : vector<8x128xf32>
    %c0_32 = arith.constant 0 : index
    %c256 = arith.constant 256 : index
    %85 = vector.load %arg6[%c0_32, %c256] : memref<8x512xf32, #tpu.memory_space<vmem>>, vector<8x128xf32>
    tpu.vector_store %arg6[%c0_32, %c256], %84 {strides = array<i32>} : memref<8x512xf32, #tpu.memory_space<vmem>>, vector<8x128xf32>,
    %86 = vector.extract_strided_slice %61 {offsets = [24, 0], sizes = [8, 128], strides = [1, 1]} : vector<32x128xf32> to vector<8x128xf32>
    %cst_33 = arith.constant 5.000000e-01 : f32
    %87 = vector.broadcast %cst_33 : f32 to vector<8x128xf32>
    %88 = arith.mulf %86, %87 : vector<8x128xf32>
    %89 = vector.extract_strided_slice %0 {offsets = [0, 384], sizes = [8, 128], strides = [1, 1]} : vector<8x512xf32> to vector<8x128xf32>
    %cst_34 = arith.constant 5.000000e-01 : f32
    %90 = vector.broadcast %cst_34 : f32 to vector<8x128xf32>
    %91 = arith.mulf %89, %90 : vector<8x128xf32>
    %92 = arith.addf %88, %91 : vector<8x128xf32>
    %c0_35 = arith.constant 0 : index
    %c384 = arith.constant 384 : index
    %93 = vector.load %arg6[%c0_35, %c384] : memref<8x512xf32, #tpu.memory_space<vmem>>, vector<8x128xf32>
    tpu.vector_store %arg6[%c0_35, %c384], %92 {strides = array<i32>} : memref<8x512xf32, #tpu.memory_space<vmem>>, vector<8x128xf32>,
    return
  }
  func.func @transform_0(%arg0: i32) -> (i32, i32) {
    %c0_i32 = arith.constant 0 : i32
    %c0_i32_0 = arith.constant 0 : i32
    %c0_i32_1 = arith.constant 0 : i32
    return %c0_i32, %c0_i32_0 : i32, i32
  }
  func.func @transform_1(%arg0: i32) -> (i32, i32) {
    %c0_i32 = arith.constant 0 : i32
    %c0_i32_0 = arith.constant 0 : i32
    %c0_i32_1 = arith.constant 0 : i32
    return %c0_i32, %c0_i32_0 : i32, i32
  }
  func.func @transform_2(%arg0: i32) -> (i32, i32) {
    %c0_i32 = arith.constant 0 : i32
    %c0_i32_0 = arith.constant 0 : i32
    %c0_i32_1 = arith.constant 0 : i32
    return %c0_i32, %c0_i32_0 : i32, i32
  }
  func.func @transform_3(%arg0: i32) -> (i32, i32) {
    %c0_i32 = arith.constant 0 : i32
    %c0_i32_0 = arith.constant 0 : i32
    %c0_i32_1 = arith.constant 0 : i32
    return %c0_i32, %c0_i32_0 : i32, i32
  }
  func.func @transform_4(%arg0: i32) -> (i32, i32) {
    %c0_i32 = arith.constant 0 : i32
    %c0_i32_0 = arith.constant 0 : i32
    %c0_i32_1 = arith.constant 0 : i32
    return %c0_i32, %c0_i32_0 : i32, i32
  }
  func.func @transform_5(%arg0: i32) -> (i32, i32) {
    %c0_i32 = arith.constant 0 : i32
    %c0_i32_0 = arith.constant 0 : i32
    %c0_i32_1 = arith.constant 0 : i32
    return %c0_i32, %c0_i32_0 : i32, i32
  }
}

</mosaic_0001>

<llo_original>
// kernel: adapter_forward.1
$region0: #{adapter_forward.1}
  #allocation0 [shape = 'u32[]', space=smem, size = 0x4, offset = 0x4, fixed_abs, tag = 'smem constant byte address 0x4 - core index']
  #allocation1 [shape = 'u32[144,128]{1,0:T(1,128)}', space=vmem, size = 0x12000, scoped, tag = 'internal scratch']
  %s0 = inlined_call_operand.hbm [shape: f32[8,512], index: 0, kind: input, shape index: {}, may-alias: {0,5}]
  %s1 = inlined_call_operand.vmem [shape: f32[128,16], index: 1, kind: input, shape index: {}]
  %s2 = inlined_call_operand.vmem [shape: f32[1,16], index: 2, kind: input, shape index: {}]
  %s3 = inlined_call_operand.vmem [shape: bf16[16,128], index: 3, kind: input, shape index: {}]
  %s4 = inlined_call_operand.vmem [shape: f32[1,128], index: 4, kind: input, shape index: {}]
  %s5 = inlined_call_operand.hbm [shape: f32[8,512], index: 5, kind: output, shape index: {}, may-alias: {0,5}]
  %s6 = sld [smem:[#allocation0]]
  $region34: #{adapter_forward.1} parent=0
    _
  %s8 = ssub.s32 1, %s6
  %s9 = scalar_select 0, %s8, %s6
  $region1: #{adapter_forward.1} parent=0
    #allocation2 [shape = 'u8[16384]{0}', space=vmem, size = 0x4000, scoped, tag = 'input window, operand 0, single buffered']
    #allocation3 [shape = 's32[1]{0}', space=sflag, size = 0x4, scoped, tag = 'scoped memory for adapter_forward.1']
    #allocation4 [shape = 's32[1]{0}', space=sflag, size = 0x4, scoped, tag = 'scoped memory for adapter_forward.1']
    #allocation5 [shape = 'u8[16384]{0}', space=vmem, size = 0x4000, scoped, tag = 'output window, operand 0, single buffered']
    %10 = vsyncpa [#allocation3], 0
    %11 = vsyncpa [#allocation4], 0
    // Predicated region
    $region2: #{adapter_forward.1} parent=1 // pred_check
      _
    $region3: #{adapter_forward.1} parent=1 // pred_check_branch
      %13 = sbr.rel (0) target = $region5
    $region4: #{adapter_forward.1} parent=1 // pred_region
      %s15 = ssub.s32 512, 512
      %16 = vsyncadd [#allocation3], %s15
      %s18 = sshll.u32 [#allocation2], 4
      %s19 = int_to_ptr.vmem [resolvable:$true] %s18
      %21 = dma.hbm_to_vmem [thread:$0]  %s0, 512, %s19, [#allocation3]
    $region5: #{adapter_forward.1} parent=1 // pred_fallthru
      _
    // Predicated region
    $region6: #{adapter_forward.1} parent=1 // pred_check
      _
    $region7: #{adapter_forward.1} parent=1 // pred_check_branch
      %23 = sbr.rel (0) target = $region9
    $region8: #{adapter_forward.1} parent=1 // pred_region
      _
    $region9: #{adapter_forward.1} parent=1 // pred_fallthru
      _
    // Predicated region
    $region10: #{adapter_forward.1} parent=1 // pred_check
      _
    $region11: #{adapter_forward.1} parent=1 // pred_check_branch
      %25 = sbr.rel (0) target = $region13
    $region12: #{adapter_forward.1} parent=1 // pred_region
      _
    $region13: #{adapter_forward.1} parent=1 // pred_fallthru
      _
    // Predicated region
    $region14: #{adapter_forward.1} parent=1 // pred_check
      _
    $region15: #{adapter_forward.1} parent=1 // pred_check_branch
      %27 = sbr.rel (0) target = $region17
    $region16: #{adapter_forward.1} parent=1 // pred_region
      _
    $region17: #{adapter_forward.1} parent=1 // pred_fallthru
      _
    // Predicated region
    $region18: #{adapter_forward.1} parent=1 // pred_check
      _
    $region19: #{adapter_forward.1} parent=1 // pred_check_branch
      %29 = sbr.rel (0) target = $region21
    $region20: #{adapter_forward.1} parent=1 // pred_region
      _
    $region21: #{adapter_forward.1} parent=1 // pred_fallthru
      _
    // Predicated region
    $region22: #{adapter_forward.1} parent=1 // pred_check
      _
    $region23: #{adapter_forward.1} parent=1 // pred_check_branch
      %31 = sbr.rel (0) target = $region25
    $region24: #{adapter_forward.1} parent=1 // pred_region
      %32 = dma.done [#allocation3], 512
    $region25: #{adapter_forward.1} parent=1 // pred_fallthru
      _
    %v34 = vld [vmem:[#allocation2] sm:$0xff]
    %v35 = vld [vmem:[#allocation2 + $0x8] sm:$0xff]
    %v36 = vld [vmem:[#allocation2 + $0x10] sm:$0xff]
    %v37 = vld [vmem:[#allocation2 + $0x18] sm:$0xff]
    %v38 = vld [vmem:[%s1] sm:$0xff]
    %v39 = vld [vmem:[%s1 + $0x8] sm:$0xff]
    %v40 = vld [vmem:[%s1 + $0x10] sm:$0xff]
    %v41 = vld [vmem:[%s1 + $0x18] sm:$0xff]
    %v42 = vld [vmem:[%s1 + $0x20] sm:$0xff]
    %v43 = vld [vmem:[%s1 + $0x28] sm:$0xff]
    %v44 = vld [vmem:[%s1 + $0x30] sm:$0xff]
    %v45 = vld [vmem:[%s1 + $0x38] sm:$0xff]
    %v46 = vld [vmem:[%s1 + $0x40] sm:$0xff]
    %v47 = vld [vmem:[%s1 + $0x48] sm:$0xff]
    %v48 = vld [vmem:[%s1 + $0x50] sm:$0xff]
    %v49 = vld [vmem:[%s1 + $0x58] sm:$0xff]
    %v50 = vld [vmem:[%s1 + $0x60] sm:$0xff]
    %v51 = vld [vmem:[%s1 + $0x68] sm:$0xff]
    %v52 = vld [vmem:[%s1 + $0x70] sm:$0xff]
    %v53 = vld [vmem:[%s1 + $0x78] sm:$0xff]
    %v54 = vld [vmem:[%s2] sm:$0x1]
    %v56 = vlaneseq
    %v57 = vshrl.u32 %v56, 7
    %v58 = vsub.s32 0, %v57
    %v59 = vrot.slane %v54, %v58
    %61 = vmatprep.subr.mxu0 0.0
    %62 = vmatpush1.msra.mxu0 %v38
    %63 = vmatprep.subr.mxu0 0.0
    %64 = vmatpush1.msra.mxu0 %v39
    %65 = vmatprep.subr.mxu0 0.0
    %66 = vmatpush1.msra.mxu0 %v40
    %67 = vmatprep.subr.mxu0 0.0
    %68 = vmatpush1.msra.mxu0 %v41
    %69 = vmatprep.subr.mxu0 0.0
    %70 = vmatpush1.msra.mxu0 %v42
    %71 = vmatprep.subr.mxu0 0.0
    %72 = vmatpush1.msra.mxu0 %v43
    %73 = vmatprep.subr.mxu0 0.0
    %74 = vmatpush1.msra.mxu0 %v44
    %75 = vmatprep.subr.mxu0 0.0
    %76 = vmatpush1.msra.mxu0 %v45
    %77 = vmatprep.subr.mxu0 0.0
    %78 = vmatpush1.msra.mxu0 %v46
    %79 = vmatprep.subr.mxu0 0.0
    %80 = vmatpush1.msra.mxu0 %v47
    %81 = vmatprep.subr.mxu0 0.0
    %82 = vmatpush1.msra.mxu0 %v48
    %83 = vmatprep.subr.mxu0 0.0
    %84 = vmatpush1.msra.mxu0 %v49
    %85 = vmatprep.subr.mxu0 0.0
    %86 = vmatpush1.msra.mxu0 %v50
    %87 = vmatprep.subr.mxu0 0.0
    %88 = vmatpush1.msra.mxu0 %v51
    %89 = vmatprep.subr.mxu0 0.0
    %90 = vmatpush1.msra.mxu0 %v52
    %91 = vmatprep.subr.mxu0 0.0
    %92 = vmatpush1.msra.mxu0 %v53
    %93 = vmatprep.subr.mxu0 0.0
    %94 = vmatpush1.msra.mxu0 0.0
    %95 = vmatprep.subr.mxu0 0.0
    %96 = vmatpush1.msra.mxu0 0.0
    %97 = vmatprep.subr.mxu0 0.0
    %98 = vmatpush1.msra.mxu0 0.0
    %99 = vmatprep.subr.mxu0 0.0
    %100 = vmatpush1.msra.mxu0 0.0
    %101 = vmatprep.subr.mxu0 0.0
    %102 = vmatpush1.msra.mxu0 0.0
    %103 = vmatprep.subr.mxu0 0.0
    %104 = vmatpush1.msra.mxu0 0.0
    %105 = vmatprep.subr.mxu0 0.0
    %106 = vmatpush1.msra.mxu0 0.0
    %107 = vmatprep.subr.mxu0 0.0
    %108 = vmatpush1.msra.mxu0 0.0
    %109 = vmatprep.subr.mxu0 0.0
    %110 = vmatpush1.msra.mxu0 0.0
    %111 = vmatprep.subr.mxu0 0.0
    %112 = vmatpush1.msra.mxu0 0.0
    %113 = vmatprep.subr.mxu0 0.0
    %114 = vmatpush1.msra.mxu0 0.0
    %115 = vmatprep.subr.mxu0 0.0
    %116 = vmatpush1.msra.mxu0 0.0
    %117 = vmatprep.subr.mxu0 0.0
    %118 = vmatpush1.msra.mxu0 0.0
    %119 = vmatprep.subr.mxu0 0.0
    %120 = vmatpush1.msra.mxu0 0.0
    %121 = vmatprep.subr.mxu0 0.0
    %122 = vmatpush1.msra.mxu0 0.0
    %123 = vmatprep.subr.mxu0 0.0
    %124 = vmatpush1.msra.mxu0 0.0
    %125 = vmatprep.mubr.f32.mxu0 0.0
    %126 = vmatmul.mubr.f32.gmra.mrb[0].mxu0 %v34
    %v127 = vpop.f32.mrb[0].mxu0
    %v128 = vadd.f32 %v59, %v127
    %v129 = vpop.f32.mrb[0].mxu0
    %130 = vmatprep.mubr.f32.mxu0 0.0
    %131 = vmatmul.mubr.f32.gmra.mrb[0].mxu0 %v35
    %v132 = vpop.f32.mrb[0].mxu0
    %v133 = vadd.f32 %v59, %v132
    %v134 = vpop.f32.mrb[0].mxu0
    %135 = vmatprep.mubr.f32.mxu0 0.0
    %136 = vmatmul.mubr.f32.gmra.mrb[0].mxu0 %v36
    %v137 = vpop.f32.mrb[0].mxu0
    %v138 = vadd.f32 %v59, %v137
    %v139 = vpop.f32.mrb[0].mxu0
    %140 = vmatprep.mubr.f32.mxu0 0.0
    %141 = vmatmul.mubr.f32.gmra.mrb[0].mxu0 %v37
    %v142 = vpop.f32.mrb[0].mxu0
    %v143 = vadd.f32 %v59, %v142
    %v144 = vpop.f32.mrb[0].mxu0
    %145 = vdwg.mxu0
    %v146 = vadd.f32 %v128, 0.0
    %vm147 = vcmp.ge.f32.partialorder %v146, 0.5
    %v148 = vsel %vm147, 1, 0
    %v149 = vcvt.s32.f32 %v148
    %v150 = vpack.c.bf16 %v149, %v149
    %v151 = vsel %vm147, 0.0, %v146
    %v152 = vmul.f32 %v151, 0.25
    %v153 = vadd.f32 %v152, %v133
    %vm154 = vcmp.ge.f32.partialorder %v153, 0.5
    %v155 = vsel %vm154, 1, 0
    %v156 = vcvt.s32.f32 %v155
    %v157 = vpack.c.bf16 %v156, %v156
    %v158 = vsel %vm154, 0.0, %v153
    %v159 = vmul.f32 %v158, 0.25
    %v160 = vadd.f32 %v159, %v138
    %vm161 = vcmp.ge.f32.partialorder %v160, 0.5
    %v162 = vsel %vm161, 1, 0
    %v163 = vcvt.s32.f32 %v162
    %v164 = vpack.c.bf16 %v163, %v163
    %v165 = vsel %vm161, 0.0, %v160
    %v166 = vmul.f32 %v165, 0.25
    %v167 = vadd.f32 %v166, %v143
    %vm168 = vcmp.ge.f32.partialorder %v167, 0.5
    %v169 = vsel %vm168, 1, 0
    %v170 = vcvt.s32.f32 %v169
    %v171 = vpack.c.bf16 %v170, %v170
    %v173 = vrot.slane %v157, 4
    %v175 = vrot.slane %v171, 4
    %vm176 = vcmask 1043456
    %v179 = vsel %vm176, %v150, %v173
    %v182 = vsel %vm176, %v164, %v175
    %v183 = vld [vmem:[%s3] sm:$0xf]
    %v184 = vld [vmem:[%s3 + $0x4] sm:$0xf]
    %v185 = vld [vmem:[%s4] sm:$0x1]
    %v187 = vlaneseq
    %v188 = vshrl.u32 %v187, 7
    %v189 = vsub.s32 0, %v188
    %v190 = vrot.slane %v185, %v189
    %v194 = vunpack.c.l.b16 %v183
    %v195 = vunpack.c.l.b16 %v184
    %v196 = vpack.c.b16 %v195, %v194
    %vm198 = vcmask 130048
    %v199 = vsel %vm198, %v179, 0
    %v201 = vsel %vm198, %v182, 0
    %203 = vmatprep.subr.bf16.mxu0 0
    %204 = vmatpush1.bf16.msra.mxu0 %v196
    %205 = vmatprep.subr.bf16.mxu0 0
    %206 = vmatpush1.bf16.msra.mxu0 0
    %207 = vmatprep.subr.bf16.mxu0 0
    %208 = vmatpush1.bf16.msra.mxu0 0
    %209 = vmatprep.subr.bf16.mxu0 0
    %210 = vmatpush1.bf16.msra.mxu0 0
    %211 = vmatprep.subr.bf16.mxu0 0
    %212 = vmatpush1.bf16.msra.mxu0 0
    %213 = vmatprep.subr.bf16.mxu0 0
    %214 = vmatpush1.bf16.msra.mxu0 0
    %215 = vmatprep.subr.bf16.mxu0 0
    %216 = vmatpush1.bf16.msra.mxu0 0
    %217 = vmatprep.subr.bf16.mxu0 0
    %218 = vmatpush1.bf16.msra.mxu0 0
    %219 = vmatprep.subr.bf16.mxu0 0
    %220 = vmatpush1.bf16.msra.mxu0 0
    %221 = vmatprep.subr.bf16.mxu0 0
    %222 = vmatpush1.bf16.msra.mxu0 0
    %223 = vmatprep.subr.bf16.mxu0 0
    %224 = vmatpush1.bf16.msra.mxu0 0
    %225 = vmatprep.subr.bf16.mxu0 0
    %226 = vmatpush1.bf16.msra.mxu0 0
    %227 = vmatprep.subr.bf16.mxu0 0
    %228 = vmatpush1.bf16.msra.mxu0 0
    %229 = vmatprep.subr.bf16.mxu0 0
    %230 = vmatpush1.bf16.msra.mxu0 0
    %231 = vmatprep.subr.bf16.mxu0 0
    %232 = vmatpush1.bf16.msra.mxu0 0
    %233 = vmatprep.subr.bf16.mxu0 0
    %234 = vmatpush1.bf16.msra.mxu0 0
    %235 = vmatprep.mubr.bf16.mxu0 0
    %236 = vmatmul.mubr.bf16.gmra.mrb[0].mxu0 %v199
    %v237 = vpop.f32.mrb[0].mxu0
    %v238 = vadd.f32 %v190, %v237
    %v239 = vpop.f32.mrb[0].mxu0
    %v240 = vpop.f32.mrb[0].mxu0
    %v241 = vadd.f32 %v190, %v240
    %v242 = vpop.f32.mrb[0].mxu0
    %243 = vmatprep.mubr.bf16.mxu0 0
    %244 = vmatmul.mubr.bf16.gmra.mrb[0].mxu0 %v201
    %v245 = vpop.f32.mrb[0].mxu0
    %v246 = vadd.f32 %v190, %v245
    %v247 = vpop.f32.mrb[0].mxu0
    %v248 = vpop.f32.mrb[0].mxu0
    %v249 = vadd.f32 %v190, %v248
    %v250 = vpop.f32.mrb[0].mxu0
    %251 = vdwg.mxu0
    %v252 = vmax.f32 %v238, 0.0
    %v253 = vmax.f32 %v241, 0.0
    %v254 = vmax.f32 %v246, 0.0
    %v255 = vmax.f32 %v249, 0.0
    %v256 = vmul.f32 %v252, 0.5
    %v257 = vmul.f32 %v34, 0.5
    %v258 = vadd.f32 %v256, %v257
    %259 = vst [vmem:[#allocation5] sm:$0xff] %v258
    %v260 = vmul.f32 %v253, 0.5
    %v261 = vmul.f32 %v35, 0.5
    %v262 = vadd.f32 %v260, %v261
    %263 = vst [vmem:[#allocation5 + $0x8] sm:$0xff] %v262
    %v264 = vmul.f32 %v254, 0.5
    %v265 = vmul.f32 %v36, 0.5
    %v266 = vadd.f32 %v264, %v265
    %267 = vst [vmem:[#allocation5 + $0x10] sm:$0xff] %v266
    %v268 = vmul.f32 %v255, 0.5
    %v269 = vmul.f32 %v37, 0.5
    %v270 = vadd.f32 %v268, %v269
    %271 = vst [vmem:[#allocation5 + $0x18] sm:$0xff] %v270
    // Predicated region
    $region26: #{adapter_forward.1} parent=1 // pred_check
      _
    $region27: #{adapter_forward.1} parent=1 // pred_check_branch
      %273 = sbr.rel (0) target = $region29
    $region28: #{adapter_forward.1} parent=1 // pred_region
      %s275 = ssub.s32 512, 512
      %276 = vsyncadd [#allocation4], %s275
      %s278 = sshll.u32 [#allocation5], 4
      %s279 = int_to_ptr.vmem [resolvable:$true] %s278
      %281 = dma.vmem_to_hbm [thread:$0]  %s279, 512, %s5, [#allocation4]
    $region29: #{adapter_forward.1} parent=1 // pred_fallthru
      _
    // Predicated region
    $region30: #{adapter_forward.1} parent=1 // pred_check
      _
    $region31: #{adapter_forward.1} parent=1 // pred_check_branch
      %283 = sbr.rel (0) target = $region33
    $region32: #{adapter_forward.1} parent=1 // pred_region
      %284 = dma.done [#allocation4], 512
    $region33: #{adapter_forward.1} parent=1 // pred_fallthru
      _
    %285 = vsyncpa [#allocation3], 1
    %286 = vsyncpa [#allocation4], 1

</llo_original>
